<compile_context>
chip_gen: v7x
topology: tpu7x:2x2x1
jax: 0.10.0
libtpu: 0.0.40
codegen_flags: <defaults>
</compile_context>

<pallas_src>
import functools
import math

import jax
import jax.numpy as jnp
from jax.experimental import pallas as pl
from jax.experimental.pallas import tpu as pltpu

EPSILON = 1e-06
_LANE = 128


def _cdiv(a: int, m: int) -> int:
    return (a + m - 1) // m


def _round_up(a: int, m: int) -> int:
    return _cdiv(a, m) * m


def _sigmoid_flow_kernel(p_ref, x_ref, xnew_ref, ld_ref, *, linear_jacobian):
    # p_ref : (3H, TT) params slab (a | b | pre_w bands along sublanes)
    # x_ref : (1, TT)  outputs : (1, TT) each
    H = p_ref.shape[0] // 3

    # Static sublane slices (zero-cost views when H is a multiple of 8).
    pa = p_ref[0:H, :].astype(jnp.float32)               # a params    (H, TT)
    b = p_ref[H:2 * H, :].astype(jnp.float32)            # b params    (H, TT)
    pre_w = p_ref[2 * H:3 * H, :].astype(jnp.float32)    # pre_w       (H, TT)
    x = x_ref[...].astype(jnp.float32)                   # (1, TT), bcast over H

    a = jax.nn.softplus(pa) + EPSILON                    # (H, TT)

    # Softmax statistics over the hidden (sublane) axis, shared max / log-sum.
    mx_w = jnp.max(pre_w, axis=0, keepdims=True)         # (1, TT)
    e_w = jnp.exp(pre_w - mx_w)                          # (H, TT)
    s_w = jnp.sum(e_w, axis=0, keepdims=True)            # (1, TT)
    log_s_w = jnp.log(s_w)                               # (1, TT)

    pre_sigm = a * x + b                                 # (H, TT)

    if linear_jacobian:
        # Linear-space Jacobian sum: fewer EUP ops, but sigm*(1-sigm)
        # underflows for |a*x + b| >~ 88 in f32 -> keep behind a flag.
        sigm = jax.nn.sigmoid(pre_sigm)
        jac = (e_w * a) * (sigm * (1.0 - sigm))
        logj = (jnp.log(jnp.sum(jac, axis=0, keepdims=True))
                - log_s_w - 2.0 * EPSILON)
    else:
        sp_neg = jax.nn.softplus(-pre_sigm)              # softplus(-z)
        sigm = jnp.exp(-sp_neg)                          # sigmoid(z)=exp(-softplus(-z))
        # log_sigmoid(z) + log_sigmoid(-z) = -2*softplus(-z) - z - 2*EPS.
        # Per-token constants (-mx_w - log_s_w - 2*EPS) are pulled out of the
        # logsumexp so the (H, TT) elementwise chain stays short.
        v = pre_w + jnp.log(a) - 2.0 * sp_neg - pre_sigm  # (H, TT)
        mx_v = jnp.max(v, axis=0, keepdims=True)
        logj = (jnp.log(jnp.sum(jnp.exp(v - mx_v), axis=0, keepdims=True))
                + mx_v - mx_w - log_s_w - 2.0 * EPSILON)

    # Division-free clipped logit.  With S = sum(e_w * sigm), x_pre = S / s_w:
    #   log(x_pre_clipped)     = log(S*(1-eps) + 0.5*eps*s_w) - log(s_w)
    #   log(1 - x_pre_clipped) = log(s_w*(1-0.5*eps) - S*(1-eps)) - log(s_w)
    # The -log(s_w) terms cancel in xnew and appear as +2*log(s_w) in logdet.
    S = jnp.sum(e_w * sigm, axis=0, keepdims=True)       # (1, TT)
    log_num_c = jnp.log(S * (1.0 - EPSILON) + (0.5 * EPSILON) * s_w)
    log_num_1mc = jnp.log(s_w * (1.0 - 0.5 * EPSILON) - S * (1.0 - EPSILON))

    xnew_ref[...] = log_num_c - log_num_1mc
    ld_ref[...] = (logj + math.log(1.0 - EPSILON)
                   - log_num_c - log_num_1mc + 2.0 * log_s_w)


def sigmoid_flow_forward(params, x, logdet, hidden_dim, *,
                         token_tile=4096, linear_jacobian=False):
    """Pallas implementation of SigmoidFlow.forward (no_logit=False)."""
    H = hidden_dim
    assert params.shape[-1] == 3 * H
    B, N = x.shape
    T = B * N

    # Single layout pass: (B, N, 3H) -view-> (T, 3H) -> one transpose (3H, T).
    # No dtype upcast here: the kernel casts after the (smaller) block load.
    p_t = params.reshape(T, 3 * H).T                     # (3H, T)
    x_t = x.reshape(1, T)                                # (1, T)

    # Token tile: lane-dense multiple of 128, large enough to amortize the
    # per-grid-step overhead, but capped so the "parallel" token axis keeps
    # >= 2 grid steps when possible (v7x megacore: 2 TensorCores per chip).
    tile = min(token_tile, _round_up(_cdiv(T, 2), _LANE))
    tile = max(_LANE, _round_up(tile, _LANE))

    # No padding in the common case: Pallas handles the ragged last block and
    # the garbage lanes are sliced off below.  Only the degenerate T < 128
    # case (a block wider than the whole array) is padded.
    if T < _LANE:
        pad = ((0, 0), (0, _LANE - T))
        p_t = jnp.pad(p_t, pad)
        x_t = jnp.pad(x_t, pad)
    T_io = max(T, _LANE)
    grid = (_cdiv(T_io, tile),)

    p_spec = pl.BlockSpec((3 * H, tile), lambda i: (0, i))
    row_spec = pl.BlockSpec((1, tile), lambda i: (0, i))

    # v7x has only 64 MiB physical VMEM (32 MiB scoped default); size the
    # limit explicitly, with headroom for the f32 (H, tile) temporaries.
    p_item = jnp.dtype(params.dtype).itemsize
    x_item = jnp.dtype(x.dtype).itemsize
    est = (2 * (3 * H * tile * p_item + tile * x_item)   # double-buffered inputs
           + 4 * tile * 4                                # outputs
           + 12 * H * tile * 4)                          # f32 temporaries
    vmem_limit = int(min(64 * 1024 * 1024, max(32 * 1024 * 1024, 2 * est)))

    kernel = functools.partial(_sigmoid_flow_kernel,
                               linear_jacobian=linear_jacobian)

    xnew_p, ld_p = pl.pallas_call(
        kernel,
        out_shape=(
            jax.ShapeDtypeStruct((1, T_io), jnp.float32),
            jax.ShapeDtypeStruct((1, T_io), jnp.float32),
        ),
        grid=grid,
        in_specs=[p_spec, row_spec],
        out_specs=(row_spec, row_spec),
        compiler_params=pltpu.CompilerParams(
            dimension_semantics=("parallel",),
            vmem_limit_bytes=vmem_limit,
        ),
    )(p_t, x_t)

    xnew = xnew_p[0, :T].reshape(B, N).astype(x.dtype)
    ld_elem = ld_p[0, :T].reshape(B, N)
    logdet_out = jnp.sum(ld_elem, axis=1) + logdet.astype(jnp.float32)
    return xnew, logdet_out


def _reference_forward(params, x, logdet, hidden_dim):
    """Pure-JAX reference mirroring the PyTorch module, for validation."""
    H = hidden_dim
    a = jax.nn.softplus(params[..., :H]) + EPSILON
    b = params[..., H:2 * H]
    pre_w = params[..., 2 * H:]
    w = jax.nn.softmax(pre_w, axis=-1)
    pre_sigm = a * x[..., None] + b
    sigm = jax.nn.sigmoid(pre_sigm)
    x_pre = jnp.sum(w * sigm, axis=-1)
    logj = (jax.nn.log_softmax(pre_w, axis=-1)
            + (-jax.nn.softplus(-pre_sigm) - EPSILON)
            + (-jax.nn.softplus(pre_sigm) - EPSILON)
            + jnp.log(a))
    mx = jnp.max(logj, axis=-1, keepdims=True)
    logj = (jnp.log(jnp.sum(jnp.exp(logj - mx), axis=-1, keepdims=True)) + mx)[..., 0]
    x_pre_clipped = x_pre * (1 - EPSILON) + EPSILON * 0.5
    xnew = jnp.log(x_pre_clipped) - jnp.log(1 - x_pre_clipped)
    logdet_ = (logj + math.log(1 - EPSILON)
               - (jnp.log(x_pre_clipped) + jnp.log(1 - x_pre_clipped)))
    logdet = jnp.sum(logdet_, axis=tuple(range(1, logdet_.ndim))) + logdet
    return xnew, logdet


if __name__ == "__main__":
    # Small shapes: batch=2, seq=100 (exercises 2 grid steps + ragged last
    # block: T = 200, tile = 128), hidden_dim=32.
    B, N, H = 2, 100, 32

    key = jax.random.PRNGKey(0)
    k_p, k_x, k_l = jax.random.split(key, 3)
    params = jax.random.normal(k_p, (B, N, 3 * H), dtype=jnp.float32) * 0.5
    x = jax.random.uniform(k_x, (B, N), dtype=jnp.float32, minval=-2.0, maxval=2.0)
    logdet = jax.random.normal(k_l, (B,), dtype=jnp.float32) * 0.1

    xnew, logdet_out = sigmoid_flow_forward(params, x, logdet, H)
    jax.block_until_ready((xnew, logdet_out))

    xnew_ref, logdet_ref = _reference_forward(params, x, logdet, H)
    assert jnp.allclose(xnew, xnew_ref, atol=5e-5, rtol=1e-5), "xnew mismatch"
    assert jnp.allclose(logdet_out, logdet_ref, atol=1e-3, rtol=1e-4), "logdet mismatch"

    print("KERNEL_OK")
</pallas_src>

<mosaic_0001>
module attributes {stable_mosaic.version = 11 : i64} {
  func.func @_sigmoid_flow_kernel(%arg0: i32, %arg1: memref<96x128xf32, #tpu.memory_space<vmem>>, %arg2: memref<1x128xf32, #tpu.memory_space<vmem>>, %arg3: memref<1x128xf32, #tpu.memory_space<vmem>>, %arg4: memref<1x128xf32, #tpu.memory_space<vmem>>) attributes {dimension_semantics = [#tpu.dimension_semantics<parallel>], iteration_bounds = array<i64: 2>, scalar_prefetch = 0 : i64, scratch_operands = 0 : i64, tpu.core_type = #tpu.core_type<tc>, window_params = [{transform_indices = @transform_0, window_bounds = array<i64: 96, 128>}, {transform_indices = @transform_1, window_bounds = array<i64: 1, 128>}, {transform_indices = @transform_2, window_bounds = array<i64: 1, 128>}, {transform_indices = @transform_3, window_bounds = array<i64: 1, 128>}]} {
    %c0 = arith.constant 0 : index
    %c0_0 = arith.constant 0 : index
    %0 = vector.load %arg1[%c0, %c0_0] : memref<96x128xf32, #tpu.memory_space<vmem>>, vector<32x128xf32>
    %c32 = arith.constant 32 : index
    %c0_1 = arith.constant 0 : index
    %1 = vector.load %arg1[%c32, %c0_1] : memref<96x128xf32, #tpu.memory_space<vmem>>, vector<32x128xf32>
    %c64 = arith.constant 64 : index
    %c0_2 = arith.constant 0 : index
    %2 = vector.load %arg1[%c64, %c0_2] : memref<96x128xf32, #tpu.memory_space<vmem>>, vector<32x128xf32>
    %c0_3 = arith.constant 0 : index
    %c0_4 = arith.constant 0 : index
    %3 = vector.load %arg2[%c0_3, %c0_4] : memref<1x128xf32, #tpu.memory_space<vmem>>, vector<1x128xf32>
    %cst = arith.constant 0.000000e+00 : f32
    %4 = vector.broadcast %cst : f32 to vector<32x128xf32>
    %5 = arith.maximumf %0, %4 : vector<32x128xf32>
    %6 = vector.broadcast %cst : f32 to vector<32x128xf32>
    %7 = arith.subf %0, %6 : vector<32x128xf32>
    %8 = arith.cmpf one, %7, %7 : vector<32x128xf32>
    %9 = vector.broadcast %cst : f32 to vector<32x128xf32>
    %10 = arith.addf %0, %9 : vector<32x128xf32>
    %11 = math.absf %7 : vector<32x128xf32>
    %cst_5 = arith.constant 0.000000e+00 : f32
    %12 = vector.broadcast %cst_5 : f32 to vector<32x128xf32>
    %13 = arith.subf %12, %11 : vector<32x128xf32>
    %14 = math.exp %13 : vector<32x128xf32>
    %15 = math.log1p %14 : vector<32x128xf32>
    %16 = arith.addf %5, %15 : vector<32x128xf32>
    %17 = arith.select %8, %10, %16 : vector<32x128xi1>, vector<32x128xf32>
    %cst_6 = arith.constant 9.99999997E-7 : f32
    %18 = vector.broadcast %cst_6 : f32 to vector<32x128xf32>
    %19 = arith.addf %17, %18 : vector<32x128xf32>
    %cst_7 = arith.constant dense<0xFF800000> : vector<128xf32>
    %20 = vector.multi_reduction <maximumf>, %2, %cst_7 [0] : vector<32x128xf32> to vector<128xf32>
    %21 = vector.shape_cast %20 : vector<128xf32> to vector<1x128xf32>
    %22 = vector.broadcast %21 : vector<1x128xf32> to vector<32x128xf32>
    %23 = arith.subf %2, %22 : vector<32x128xf32>
    %24 = math.exp %23 : vector<32x128xf32>
    %cst_8 = arith.constant dense<0.000000e+00> : vector<128xf32>
    %25 = vector.multi_reduction <add>, %24, %cst_8 [0] : vector<32x128xf32> to vector<128xf32>
    %26 = vector.shape_cast %25 : vector<128xf32> to vector<1x128xf32>
    %27 = math.log %26 : vector<1x128xf32>
    %28 = vector.broadcast %3 : vector<1x128xf32> to vector<32x128xf32>
    %29 = arith.mulf %19, %28 : vector<32x128xf32>
    %30 = arith.addf %29, %1 : vector<32x128xf32>
    %cst_9 = arith.constant 0.000000e+00 : f32
    %31 = vector.broadcast %cst_9 : f32 to vector<32x128xf32>
    %32 = arith.subf %31, %30 : vector<32x128xf32>
    %cst_10 = arith.constant 0.000000e+00 : f32
    %33 = vector.broadcast %cst_10 : f32 to vector<32x128xf32>
    %34 = arith.maximumf %32, %33 : vector<32x128xf32>
    %35 = vector.broadcast %cst_10 : f32 to vector<32x128xf32>
    %36 = arith.subf %32, %35 : vector<32x128xf32>
    %37 = arith.cmpf one, %36, %36 : vector<32x128xf32>
    %38 = vector.broadcast %cst_10 : f32 to vector<32x128xf32>
    %39 = arith.addf %32, %38 : vector<32x128xf32>
    %40 = math.absf %36 : vector<32x128xf32>
    %cst_11 = arith.constant 0.000000e+00 : f32
    %41 = vector.broadcast %cst_11 : f32 to vector<32x128xf32>
    %42 = arith.subf %41, %40 : vector<32x128xf32>
    %43 = math.exp %42 : vector<32x128xf32>
    %44 = math.log1p %43 : vector<32x128xf32>
    %45 = arith.addf %34, %44 : vector<32x128xf32>
    %46 = arith.select %37, %39, %45 : vector<32x128xi1>, vector<32x128xf32>
    %cst_12 = arith.constant 0.000000e+00 : f32
    %47 = vector.broadcast %cst_12 : f32 to vector<32x128xf32>
    %48 = arith.subf %47, %46 : vector<32x128xf32>
    %49 = math.exp %48 : vector<32x128xf32>
    %50 = math.log %19 : vector<32x128xf32>
    %51 = arith.addf %2, %50 : vector<32x128xf32>
    %cst_13 = arith.constant 2.000000e+00 : f32
    %52 = vector.broadcast %cst_13 : f32 to vector<32x128xf32>
    %53 = arith.mulf %52, %46 : vector<32x128xf32>
    %54 = arith.subf %51, %53 : vector<32x128xf32>
    %55 = arith.subf %54, %30 : vector<32x128xf32>
    %cst_14 = arith.constant dense<0xFF800000> : vector<128xf32>
    %56 = vector.multi_reduction <maximumf>, %55, %cst_14 [0] : vector<32x128xf32> to vector<128xf32>
    %57 = vector.shape_cast %56 : vector<128xf32> to vector<1x128xf32>
    %58 = vector.broadcast %57 : vector<1x128xf32> to vector<32x128xf32>
    %59 = arith.subf %55, %58 : vector<32x128xf32>
    %60 = math.exp %59 : vector<32x128xf32>
    %cst_15 = arith.constant dense<0.000000e+00> : vector<128xf32>
    %61 = vector.multi_reduction <add>, %60, %cst_15 [0] : vector<32x128xf32> to vector<128xf32>
    %62 = vector.shape_cast %61 : vector<128xf32> to vector<1x128xf32>
    %63 = math.log %62 : vector<1x128xf32>
    %64 = arith.addf %63, %57 : vector<1x128xf32>
    %65 = arith.subf %64, %21 : vector<1x128xf32>
    %66 = arith.subf %65, %27 : vector<1x128xf32>
    %cst_16 = arith.constant 2.000000e-06 : f32
    %67 = vector.broadcast %cst_16 : f32 to vector<1x128xf32>
    %68 = arith.subf %66, %67 : vector<1x128xf32>
    %69 = arith.mulf %24, %49 : vector<32x128xf32>
    %cst_17 = arith.constant dense<0.000000e+00> : vector<128xf32>
    %70 = vector.multi_reduction <add>, %69, %cst_17 [0] : vector<32x128xf32> to vector<128xf32>
    %71 = vector.shape_cast %70 : vector<128xf32> to vector<1x128xf32>
    %cst_18 = arith.constant 0.999998986 : f32
    %72 = vector.broadcast %cst_18 : f32 to vector<1x128xf32>
    %73 = arith.mulf %71, %72 : vector<1x128xf32>
    %cst_19 = arith.constant 5.000000e-07 : f32
    %74 = vector.broadcast %cst_19 : f32 to vector<1x128xf32>
    %75 = arith.mulf %74, %26 : vector<1x128xf32>
    %76 = arith.addf %73, %75 : vector<1x128xf32>
    %77 = math.log %76 : vector<1x128xf32>
    %cst_20 = arith.constant 0.999999523 : f32
    %78 = vector.broadcast %cst_20 : f32 to vector<1x128xf32>
    %79 = arith.mulf %26, %78 : vector<1x128xf32>
    %cst_21 = arith.constant 0.999998986 : f32
    %80 = vector.broadcast %cst_21 : f32 to vector<1x128xf32>
    %81 = arith.mulf %71, %80 : vector<1x128xf32>
    %82 = arith.subf %79, %81 : vector<1x128xf32>
    %83 = math.log %82 : vector<1x128xf32>
    %84 = arith.subf %77, %83 : vector<1x128xf32>
    %c0_22 = arith.constant 0 : index
    %c0_23 = arith.constant 0 : index
    %85 = vector.load %arg3[%c0_22, %c0_23] : memref<1x128xf32, #tpu.memory_space<vmem>>, vector<1x128xf32>
    tpu.vector_store %arg3[%c0_22, %c0_23], %84 {strides = array<i32>} : memref<1x128xf32, #tpu.memory_space<vmem>>, vector<1x128xf32>,
    %cst_24 = arith.constant -1.00000045E-6 : f32
    %86 = vector.broadcast %cst_24 : f32 to vector<1x128xf32>
    %87 = arith.addf %68, %86 : vector<1x128xf32>
    %88 = arith.subf %87, %77 : vector<1x128xf32>
    %89 = arith.subf %88, %83 : vector<1x128xf32>
    %cst_25 = arith.constant 2.000000e+00 : f32
    %90 = vector.broadcast %cst_25 : f32 to vector<1x128xf32>
    %91 = arith.mulf %90, %27 : vector<1x128xf32>
    %92 = arith.addf %89, %91 : vector<1x128xf32>
    %c0_26 = arith.constant 0 : index
    %c0_27 = arith.constant 0 : index
    %93 = vector.load %arg4[%c0_26, %c0_27] : memref<1x128xf32, #tpu.memory_space<vmem>>, vector<1x128xf32>
    tpu.vector_store %arg4[%c0_26, %c0_27], %92 {strides = array<i32>} : memref<1x128xf32, #tpu.memory_space<vmem>>, vector<1x128xf32>,
    return
  }
  func.func @transform_0(%arg0: i32) -> (i32, i32) {
    %c0_i32 = arith.constant 0 : i32
    %c0_i32_0 = arith.constant 0 : i32
    return %c0_i32, %arg0 : i32, i32
  }
  func.func @transform_1(%arg0: i32) -> (i32, i32) {
    %c0_i32 = arith.constant 0 : i32
    %c0_i32_0 = arith.constant 0 : i32
    return %c0_i32, %arg0 : i32, i32
  }
  func.func @transform_2(%arg0: i32) -> (i32, i32) {
    %c0_i32 = arith.constant 0 : i32
    %c0_i32_0 = arith.constant 0 : i32
    return %c0_i32, %arg0 : i32, i32
  }
  func.func @transform_3(%arg0: i32) -> (i32, i32) {
    %c0_i32 = arith.constant 0 : i32
    %c0_i32_0 = arith.constant 0 : i32
    return %c0_i32, %arg0 : i32, i32
  }
}

</mosaic_0001>

<llo_original>
// kernel: tpu_custom_call.1
$region0: #{tpu_custom_call.1}
  #allocation0 [shape = 'u32[]', space=smem, size = 0x4, offset = 0x4, fixed_abs, tag = 'smem constant byte address 0x4 - core index']
  #allocation1 [shape = 'u32[144,128]{1,0:T(1,128)}', space=vmem, size = 0x12000, scoped, tag = 'internal scratch']
  %s0 = inlined_call_operand.hbm [shape: f32[96,200], index: 0, kind: input, shape index: {}]
  %s1 = inlined_call_operand.vmem [shape: f32[1,200], index: 1, kind: input, shape index: {}]
  %s2 = inlined_call_operand.hbm [shape: f32[1,200], index: 2, kind: output, shape index: {0}]
  %s3 = inlined_call_operand.hbm [shape: f32[1,200], index: 3, kind: output, shape index: {1}]
  %4 = xla_tuple %s2, %s3
  %s5 = sld [smem:[#allocation0]]
  $region53: #{tpu_custom_call.1} parent=0
    _
  %s7 = ssub.s32 1, %s5
  %s8 = scalar_select 0, %s7, %s5
  $region1: #{tpu_custom_call.1} parent=0
    #allocation2 [shape = 'u8[98304]{0}', space=vmem, size = 0x18000, scoped, tag = 'input window, operand 0']
    #allocation3 [shape = 's32[2]{0}', space=sflag, size = 0x8, scoped, tag = 'scoped memory for tpu_custom_call.1']
    #allocation4 [shape = 's32[2]{0}', space=sflag, size = 0x8, scoped, tag = 'scoped memory for tpu_custom_call.1']
    #allocation5 [shape = 'u8[1024]{0}', space=vmem, size = 0x400, scoped, tag = 'output window, operand 0']
    #allocation6 [shape = 'u8[1024]{0}', space=vmem, size = 0x400, scoped, tag = 'output window, operand 1']
    #allocation7 [shape = 's32[2]{0}', space=sflag, size = 0x8, scoped, tag = 'scoped memory for tpu_custom_call.1']
    %9 = vsyncpa [#allocation3], 0
    %s10 = scalar_lea.sflag [#allocation3], 1
    %11 = vsyncpa %s10, 0
    %12 = vsyncpa [#allocation4], 0
    %s13 = scalar_lea.sflag [#allocation4], 1
    %14 = vsyncpa %s13, 0
    %15 = vsyncpa [#allocation7], 0
    %s16 = scalar_lea.sflag [#allocation7], 1
    %17 = vsyncpa %s16, 0
    loop: start=0, step=1, limit=4
    $region2: #{tpu_custom_call.1} parent=1 // loop_pre_header
      _
    $region3: #{tpu_custom_call.1} parent=1 // loop_header
      %s19 = sphi 0, %s23
      %p20 = scmp.ge.s32.totalorder %s19, 4
      %s29 = sphi 0, %s31
      %s32 = sphi 0, %s29
      %s33 = sphi 0, %s32
      %s49 = sphi 0, %s33
      %s55 = sphi 0, %s57
      %s58 = sphi 0, %s55
      %s59 = sphi 0, %s58
      %s75 = sphi 0, %s59
      %s81 = sphi 0, %s83
      %s84 = sphi 0, %s81
      %s85 = sphi 0, %s84
      %s101 = sphi 0, %s85
      %s107 = sphi 0, %s109
      %s110 = sphi 0, %s107
      %s111 = sphi 0, %s110
      %s127 = sphi 0, %s111
    $region4: #{tpu_custom_call.1} parent=1 // loop_header_branch
      %22 = sbr.rel (%p20) target = $region8
    $region5: #{tpu_custom_call.1} parent=1 // loop_body
      %s24 = ssub.s32 %s19, 1
      %s25 = ssub.s32 %s19, 2
      %s26 = sadd.s32 %s19, 1
      %s27 = ssub.s32 %s19, %s26
      %p28 = scmp.eq.s32.totalorder %s27, 0
      %s30 = sadd.s32 %s29, 1
      %s31 = scalar_select %p28, %s29, %s30
      %p34 = pneg %p28
      %p35 = scmp.eq.s32.totalorder %s19, 1
      %p36 = por %p34, %p35
      %p37 = scmp.ne.s32.totalorder %s29, %s32
      %p38 = scmp.eq.s32.totalorder %s19, 0
      %p39 = por %p37, %p38
      %p40 = scmp.ne.s32.totalorder %s29, %s32
      %p41 = scmp.eq.s32.totalorder %s24, 1
      %p42 = por %p40, %p41
      %p43 = scmp.ne.s32.totalorder %s32, %s33
      %p44 = scmp.eq.s32.totalorder %s24, 0
      %p45 = por %p43, %p44
      %p46 = scmp.ne.s32.totalorder %s32, %s33
      %p47 = scmp.eq.s32.totalorder %s25, 1
      %p48 = por %p46, %p47
      %p50 = scmp.ne.s32.totalorder %s33, %s49
      %p51 = scmp.eq.s32.totalorder %s25, 0
      %p52 = por %p50, %p51
      %s53 = ssub.s32 %s19, %s26
      %p54 = scmp.eq.s32.totalorder %s53, 0
      %s56 = sadd.s32 %s55, 1
      %s57 = scalar_select %p54, %s55, %s56
      %p60 = pneg %p54
      %p61 = scmp.eq.s32.totalorder %s19, 1
      %p62 = por %p60, %p61
      %p63 = scmp.ne.s32.totalorder %s55, %s58
      %p64 = scmp.eq.s32.totalorder %s19, 0
      %p65 = por %p63, %p64
      %p66 = scmp.ne.s32.totalorder %s55, %s58
      %p67 = scmp.eq.s32.totalorder %s24, 1
      %p68 = por %p66, %p67
      %p69 = scmp.ne.s32.totalorder %s58, %s59
      %p70 = scmp.eq.s32.totalorder %s24, 0
      %p71 = por %p69, %p70
      %p72 = scmp.ne.s32.totalorder %s58, %s59
      %p73 = scmp.eq.s32.totalorder %s25, 1
      %p74 = por %p72, %p73
      %p76 = scmp.ne.s32.totalorder %s59, %s75
      %p77 = scmp.eq.s32.totalorder %s25, 0
      %p78 = por %p76, %p77
      %s79 = ssub.s32 %s19, %s26
      %p80 = scmp.eq.s32.totalorder %s79, 0
      %s82 = sadd.s32 %s81, 1
      %s83 = scalar_select %p80, %s81, %s82
      %p86 = pneg %p80
      %p87 = scmp.eq.s32.totalorder %s19, 1
      %p88 = por %p86, %p87
      %p89 = scmp.ne.s32.totalorder %s81, %s84
      %p90 = scmp.eq.s32.totalorder %s19, 0
      %p91 = por %p89, %p90
      %p92 = scmp.ne.s32.totalorder %s81, %s84
      %p93 = scmp.eq.s32.totalorder %s24, 1
      %p94 = por %p92, %p93
      %p95 = scmp.ne.s32.totalorder %s84, %s85
      %p96 = scmp.eq.s32.totalorder %s24, 0
      %p97 = por %p95, %p96
      %p98 = scmp.ne.s32.totalorder %s84, %s85
      %p99 = scmp.eq.s32.totalorder %s25, 1
      %p100 = por %p98, %p99
      %p102 = scmp.ne.s32.totalorder %s85, %s101
      %p103 = scmp.eq.s32.totalorder %s25, 0
      %p104 = por %p102, %p103
      %s105 = ssub.s32 %s19, %s26
      %p106 = scmp.eq.s32.totalorder %s105, 0
      %s108 = sadd.s32 %s107, 1
      %s109 = scalar_select %p106, %s107, %s108
      %p112 = pneg %p106
      %p113 = scmp.eq.s32.totalorder %s19, 1
      %p114 = por %p112, %p113
      %p115 = scmp.ne.s32.totalorder %s107, %s110
      %p116 = scmp.eq.s32.totalorder %s19, 0
      %p117 = por %p115, %p116
      %p118 = scmp.ne.s32.totalorder %s107, %s110
      %p119 = scmp.eq.s32.totalorder %s24, 1
      %p120 = por %p118, %p119
      %p121 = scmp.ne.s32.totalorder %s110, %s111
      %p122 = scmp.eq.s32.totalorder %s24, 0
      %p123 = por %p121, %p122
      %p124 = scmp.ne.s32.totalorder %s110, %s111
      %p125 = scmp.eq.s32.totalorder %s25, 1
      %p126 = por %p124, %p125
      %p128 = scmp.ne.s32.totalorder %s111, %s127
      %p129 = scmp.eq.s32.totalorder %s25, 0
      %p130 = por %p128, %p129
      %p131 = scmp.le.s32.totalorder 1, %s19
      %p132 = scmp.lt.s32.totalorder %s19, 3
      %p133 = pnand %p131, %p132
      %p134 = pneg %p133
      // Predicated region
      $region9: #{tpu_custom_call.1} parent=5 // pred_check
        _
      $region10: #{tpu_custom_call.1} parent=5 // pred_check_branch
        %136 = sbr.rel (%p133) target = $region12
      $region11: #{tpu_custom_call.1} parent=5 // pred_region
        %s137 = ssub.s32 %s19, 1
      $region12: #{tpu_custom_call.1} parent=5 // pred_fallthru
        _
      %p138 = scmp.lt.s32.totalorder %s19, 2
      // Predicated region
      $region13: #{tpu_custom_call.1} parent=5 // pred_check
        %p139 = pneg %p138
      $region14: #{tpu_custom_call.1} parent=5 // pred_check_branch
        %141 = sbr.rel (%p139) target = $region16
      $region15: #{tpu_custom_call.1} parent=5 // pred_region
        // Predicated region
        $region17: #{tpu_custom_call.1} parent=15 // pred_check
          %p142 = pneg %p39
        $region18: #{tpu_custom_call.1} parent=15 // pred_check_branch
          %144 = sbr.rel (%p142) target = $region20
        $region19: #{tpu_custom_call.1} parent=15 // pred_region
          %s145 = sand.u32 %s29, 1
          %s146 = scalar_lea.sflag [#allocation3], %s145
          %s147 = sand.u32 %s29, 1
          %s148 = smul.addr %s147, 96
          %s149 = scalar_lea.vmem [#allocation2], %s148
          %s151 = ssub.s32 1536, 1536
          %152 = vsyncadd %s146, %s151
          %s153 = smul.addr %s19, 128
          %s154 = scalar_lea.hbm %s0, %s153
          %s155 = sshll.u32 %s149, 4
          %s156 = int_to_ptr.vmem [resolvable:$true] %s155
          %161 = dma.hbm_to_vmem [thread:$0]  %s154, 1536, %s156, %s146, 256, 128, 8
        $region20: #{tpu_custom_call.1} parent=15 // pred_fallthru
          _
        // Predicated region
        $region21: #{tpu_custom_call.1} parent=15 // pred_check
          %p162 = pneg %p65
        $region22: #{tpu_custom_call.1} parent=15 // pred_check_branch
          %164 = sbr.rel (%p162) target = $region24
        $region23: #{tpu_custom_call.1} parent=15 // pred_region
          %p165 = scmp.lt.s32.totalorder %s19, 1
          %s166 = scalar_select %p165, %s19, 1
          %s167 = scalar_lea.vmem %s1, %s166
        $region24: #{tpu_custom_call.1} parent=15 // pred_fallthru
          _
      $region16: #{tpu_custom_call.1} parent=5 // pred_fallthru
        _
      %p168 = scmp.le.s32.totalorder 1, %s19
      %p169 = scmp.lt.s32.totalorder %s19, 3
      %p170 = pnand %p168, %p169
      %p171 = pneg %p170
      // Predicated region
      $region25: #{tpu_custom_call.1} parent=5 // pred_check
        _
      $region26: #{tpu_custom_call.1} parent=5 // pred_check_branch
        %173 = sbr.rel (%p170) target = $region28
      $region27: #{tpu_custom_call.1} parent=5 // pred_region
        %s174 = ssub.s32 %s19, 1
        %s175 = sand.u32 %s32, 1
        %s176 = scalar_lea.sflag [#allocation3], %s175
        %s177 = sand.u32 %s32, 1
        %s178 = smul.addr %s177, 96
        %s179 = scalar_lea.vmem [#allocation2], %s178
        // Predicated region
        $region29: #{tpu_custom_call.1} parent=27 // pred_check
          %p180 = pneg %p45
        $region30: #{tpu_custom_call.1} parent=27 // pred_check_branch
          %182 = sbr.rel (%p180) target = $region32
        $region31: #{tpu_custom_call.1} parent=27 // pred_region
          %183 = dma.done %s176, 1536
        $region32: #{tpu_custom_call.1} parent=27 // pred_fallthru
          _
        %s184 = sand.u32 %s32, 1
        %s185 = scalar_lea.sflag [#allocation3], %s184
        %s186 = sand.u32 %s32, 1
        %s187 = smul.addr %s186, 96
        %s188 = scalar_lea.vmem [#allocation2], %s187
        %p189 = pneg %p45
        %p190 = pneg %p42
        %p191 = scmp.lt.s32.totalorder %s24, 1
        %s192 = scalar_select %p191, %s24, 1
        %s193 = scalar_lea.vmem %s1, %s192
        %p194 = pneg %p71
        %p195 = pneg %p68
        %p196 = pneg %p97
        %p197 = pneg %p94
        %s198 = sand.u32 %s84, 1
        %s199 = scalar_lea.sflag [#allocation4], %s198
        %s200 = sand.u32 %s84, 1
        %s201 = scalar_lea.vmem [#allocation5], %s200
        %p202 = pneg %p123
        %p203 = pneg %p120
        %s204 = sand.u32 %s110, 1
        %s205 = scalar_lea.sflag [#allocation7], %s204
        %s206 = sand.u32 %s110, 1
        %s207 = scalar_lea.vmem [#allocation6], %s206
        %p208 = scmp.lt.s32.totalorder %s24, 1
        %s209 = scalar_select %p208, %s24, 1
        %s210 = scalar_lea.vmem %s1, %s209
        %v211 = vld [vmem:[%s179] sm:$0xff]
        %v212 = vld [vmem:[%s179 + $0x8] sm:$0xff]
        %v213 = vld [vmem:[%s179 + $0x10] sm:$0xff]
        %v214 = vld [vmem:[%s179 + $0x18] sm:$0xff]
        %v215 = vld [vmem:[%s179 + $0x20] sm:$0xff]
        %v216 = vld [vmem:[%s179 + $0x28] sm:$0xff]
        %v217 = vld [vmem:[%s179 + $0x30] sm:$0xff]
        %v218 = vld [vmem:[%s179 + $0x38] sm:$0xff]
        %v219 = vld [vmem:[%s179 + $0x40] sm:$0xff]
        %v220 = vld [vmem:[%s179 + $0x48] sm:$0xff]
        %v221 = vld [vmem:[%s179 + $0x50] sm:$0xff]
        %v222 = vld [vmem:[%s179 + $0x58] sm:$0xff]
        %v223 = vld [vmem:[%s210] sm:$0x1]
        %v224 = vmax.f32 %v211, 0.0
        %v225 = vmax.f32 %v212, 0.0
        %v226 = vmax.f32 %v213, 0.0
        %v227 = vmax.f32 %v214, 0.0
        %vm228 = vcmp.ne.f32.partialorder %v211, %v211
        %vm229 = vcmp.ne.f32.partialorder %v212, %v212
        %vm230 = vcmp.ne.f32.partialorder %v213, %v213
        %vm231 = vcmp.ne.f32.partialorder %v214, %v214
        %v232 = vadd.f32 %v211, 0.0
        %v233 = vadd.f32 %v212, 0.0
        %v234 = vadd.f32 %v213, 0.0
        %v235 = vadd.f32 %v214, 0.0
        %v236 = vand.u32 2147483647, %v211
        %v237 = vand.u32 2147483647, %v212
        %v238 = vand.u32 2147483647, %v213
        %v239 = vand.u32 2147483647, %v214
        %v240 = vsub.f32 0.0, %v236
        %v241 = vsub.f32 0.0, %v237
        %v242 = vsub.f32 0.0, %v238
        %v243 = vsub.f32 0.0, %v239
        %v244 = vmul.f32 %v240, 1.442695
        %v245 = vpow.pop %v244
        %v246 = vmul.f32 %v241, 1.442695
        %v247 = vpow.pop %v246
        %v248 = vmul.f32 %v242, 1.442695
        %v249 = vpow.pop %v248
        %v250 = vmul.f32 %v243, 1.442695
        %v251 = vpow.pop %v250
        %v252 = vadd.f32 %v245, 1.0
        %v253 = vlog2.pop %v252
        %v254 = vmul.f32 %v253, 0.6931472
        %v255 = vmul.f32 -0.5, %v245
        %v256 = vadd.f32 %v255, 1.0
        %v257 = vmul.f32 %v256, %v245
        %v258 = vand.u32 2147483647, %v245
        %vm259 = vcmp.lt.f32.partialorder %v258, 0.0004427343
        %v260 = vsel %vm259, %v257, %v254
        %v261 = vadd.f32 %v247, 1.0
        %v262 = vlog2.pop %v261
        %v263 = vmul.f32 %v262, 0.6931472
        %v264 = vmul.f32 -0.5, %v247
        %v265 = vadd.f32 %v264, 1.0
        %v266 = vmul.f32 %v265, %v247
        %v267 = vand.u32 2147483647, %v247
        %vm268 = vcmp.lt.f32.partialorder %v267, 0.0004427343
        %v269 = vsel %vm268, %v266, %v263
        %v270 = vadd.f32 %v249, 1.0
        %v271 = vlog2.pop %v270
        %v272 = vmul.f32 %v271, 0.6931472
        %v273 = vmul.f32 -0.5, %v249
        %v274 = vadd.f32 %v273, 1.0
        %v275 = vmul.f32 %v274, %v249
        %v276 = vand.u32 2147483647, %v249
        %vm277 = vcmp.lt.f32.partialorder %v276, 0.0004427343
        %v278 = vsel %vm277, %v275, %v272
        %v279 = vadd.f32 %v251, 1.0
        %v280 = vlog2.pop %v279
        %v281 = vmul.f32 %v280, 0.6931472
        %v282 = vmul.f32 -0.5, %v251
        %v283 = vadd.f32 %v282, 1.0
        %v284 = vmul.f32 %v283, %v251
        %v285 = vand.u32 2147483647, %v251
        %vm286 = vcmp.lt.f32.partialorder %v285, 0.0004427343
        %v287 = vsel %vm286, %v284, %v281
        %v288 = vadd.f32 %v224, %v260
        %v289 = vadd.f32 %v225, %v269
        %v290 = vadd.f32 %v226, %v278
        %v291 = vadd.f32 %v227, %v287
        %v292 = vsel %vm228, %v232, %v288
        %v293 = vsel %vm229, %v233, %v289
        %v294 = vsel %vm230, %v234, %v290
        %v295 = vsel %vm231, %v235, %v291
        %v296 = vadd.f32 %v292, 1e-06
        %v297 = vadd.f32 %v293, 1e-06
        %v298 = vadd.f32 %v294, 1e-06
        %v299 = vadd.f32 %v295, 1e-06
        %v300 = vmax.f32 %v219, %v220
        %v301 = vmax.f32 %v221, %v222
        %v302 = vmax.f32 %v300, %v301
        %v303 = vrot.slane %v302, 4
        %v304 = vmax.f32 %v302, %v303
        %v305 = vrot.slane %v304, 2
        %v306 = vmax.f32 %v304, %v305
        %v307 = vrot.slane %v306, 1
        %v308 = vmax.f32 %v306, %v307
        %v309 = vsub.f32 %v219, %v308
        %v310 = vsub.f32 %v220, %v308
        %v311 = vsub.f32 %v221, %v308
        %v312 = vsub.f32 %v222, %v308
        %v313 = vmul.f32 %v309, 1.442695
        %v314 = vpow.pop %v313
        %v315 = vmul.f32 %v310, 1.442695
        %v316 = vpow.pop %v315
        %v317 = vmul.f32 %v311, 1.442695
        %v318 = vpow.pop %v317
        %v319 = vmul.f32 %v312, 1.442695
        %v320 = vpow.pop %v319
        %v321 = vadd.f32 %v314, %v316
        %v322 = vadd.f32 %v321, %v318
        %v323 = vadd.f32 %v322, %v320
        %v324 = vrot.slane %v323, 4
        %v325 = vadd.f32 %v323, %v324
        %v326 = vrot.slane %v325, 2
        %v327 = vadd.f32 %v325, %v326
        %v328 = vrot.slane %v327, 1
        %v329 = vadd.f32 %v327, %v328
        %v330 = vlog2.pop %v329
        %v331 = vmul.f32 %v330, 0.6931472
        %v333 = vlaneseq
        %v334 = vshrl.u32 %v333, 7
        %v335 = vsub.s32 0, %v334
        %v336 = vrot.slane %v223, %v335
        %v338 = vmul.f32 %v296, %v336
        %v339 = vmul.f32 %v297, %v336
        %v340 = vmul.f32 %v298, %v336
        %v341 = vmul.f32 %v299, %v336
        %v342 = vadd.f32 %v338, %v215
        %v343 = vadd.f32 %v339, %v216
        %v344 = vadd.f32 %v340, %v217
        %v345 = vadd.f32 %v341, %v218
        %v346 = vsub.f32 0.0, %v342
        %v347 = vsub.f32 0.0, %v343
        %v348 = vsub.f32 0.0, %v344
        %v349 = vsub.f32 0.0, %v345
        %v350 = vmax.f32 %v346, 0.0
        %v351 = vmax.f32 %v347, 0.0
        %v352 = vmax.f32 %v348, 0.0
        %v353 = vmax.f32 %v349, 0.0
        %vm354 = vcmp.ne.f32.partialorder %v346, %v346
        %vm355 = vcmp.ne.f32.partialorder %v347, %v347
        %vm356 = vcmp.ne.f32.partialorder %v348, %v348
        %vm357 = vcmp.ne.f32.partialorder %v349, %v349
        %v358 = vadd.f32 %v346, 0.0
        %v359 = vadd.f32 %v347, 0.0
        %v360 = vadd.f32 %v348, 0.0
        %v361 = vadd.f32 %v349, 0.0
        %v362 = vand.u32 2147483647, %v346
        %v363 = vand.u32 2147483647, %v347
        %v364 = vand.u32 2147483647, %v348
        %v365 = vand.u32 2147483647, %v349
        %v366 = vsub.f32 0.0, %v362
        %v367 = vsub.f32 0.0, %v363
        %v368 = vsub.f32 0.0, %v364
        %v369 = vsub.f32 0.0, %v365
        %v370 = vmul.f32 %v366, 1.442695
        %v371 = vpow.pop %v370
        %v372 = vmul.f32 %v367, 1.442695
        %v373 = vpow.pop %v372
        %v374 = vmul.f32 %v368, 1.442695
        %v375 = vpow.pop %v374
        %v376 = vmul.f32 %v369, 1.442695
        %v377 = vpow.pop %v376
        %v378 = vadd.f32 %v371, 1.0
        %v379 = vlog2.pop %v378
        %v380 = vmul.f32 %v379, 0.6931472
        %v381 = vmul.f32 -0.5, %v371
        %v382 = vadd.f32 %v381, 1.0
        %v383 = vmul.f32 %v382, %v371
        %v384 = vand.u32 2147483647, %v371
        %vm385 = vcmp.lt.f32.partialorder %v384, 0.0004427343
        %v386 = vsel %vm385, %v383, %v380
        %v387 = vadd.f32 %v373, 1.0
        %v388 = vlog2.pop %v387
        %v389 = vmul.f32 %v388, 0.6931472
        %v390 = vmul.f32 -0.5, %v373
        %v391 = vadd.f32 %v390, 1.0
        %v392 = vmul.f32 %v391, %v373
        %v393 = vand.u32 2147483647, %v373
        %vm394 = vcmp.lt.f32.partialorder %v393, 0.0004427343
        %v395 = vsel %vm394, %v392, %v389
        %v396 = vadd.f32 %v375, 1.0
        %v397 = vlog2.pop %v396
        %v398 = vmul.f32 %v397, 0.6931472
        %v399 = vmul.f32 -0.5, %v375
        %v400 = vadd.f32 %v399, 1.0
        %v401 = vmul.f32 %v400, %v375
        %v402 = vand.u32 2147483647, %v375
        %vm403 = vcmp.lt.f32.partialorder %v402, 0.0004427343
        %v404 = vsel %vm403, %v401, %v398
        %v405 = vadd.f32 %v377, 1.0
        %v406 = vlog2.pop %v405
        %v407 = vmul.f32 %v406, 0.6931472
        %v408 = vmul.f32 -0.5, %v377
        %v409 = vadd.f32 %v408, 1.0
        %v410 = vmul.f32 %v409, %v377
        %v411 = vand.u32 2147483647, %v377
        %vm412 = vcmp.lt.f32.partialorder %v411, 0.0004427343
        %v413 = vsel %vm412, %v410, %v407
        %v414 = vadd.f32 %v350, %v386
        %v415 = vadd.f32 %v351, %v395
        %v416 = vadd.f32 %v352, %v404
        %v417 = vadd.f32 %v353, %v413
        %v418 = vsel %vm354, %v358, %v414
        %v419 = vsel %vm355, %v359, %v415
        %v420 = vsel %vm356, %v360, %v416
        %v421 = vsel %vm357, %v361, %v417
        %v422 = vsub.f32 0.0, %v418
        %v423 = vsub.f32 0.0, %v419
        %v424 = vsub.f32 0.0, %v420
        %v425 = vsub.f32 0.0, %v421
        %v426 = vmul.f32 %v422, 1.442695
        %v427 = vpow.pop %v426
        %v428 = vmul.f32 %v423, 1.442695
        %v429 = vpow.pop %v428
        %v430 = vmul.f32 %v424, 1.442695
        %v431 = vpow.pop %v430
        %v432 = vmul.f32 %v425, 1.442695
        %v433 = vpow.pop %v432
        %v434 = vlog2.pop %v296
        %v435 = vmul.f32 %v434, 0.6931472
        %v436 = vlog2.pop %v297
        %v437 = vmul.f32 %v436, 0.6931472
        %v438 = vlog2.pop %v298
        %v439 = vmul.f32 %v438, 0.6931472
        %v440 = vlog2.pop %v299
        %v441 = vmul.f32 %v440, 0.6931472
        %v442 = vadd.f32 %v219, %v435
        %v443 = vadd.f32 %v220, %v437
        %v444 = vadd.f32 %v221, %v439
        %v445 = vadd.f32 %v222, %v441
        %v446 = vmul.f32 %v418, 2.0
        %v447 = vmul.f32 %v419, 2.0
        %v448 = vmul.f32 %v420, 2.0
        %v449 = vmul.f32 %v421, 2.0
        %v450 = vsub.f32 %v442, %v446
        %v451 = vsub.f32 %v443, %v447
        %v452 = vsub.f32 %v444, %v448
        %v453 = vsub.f32 %v445, %v449
        %v454 = vsub.f32 %v450, %v342
        %v455 = vsub.f32 %v451, %v343
        %v456 = vsub.f32 %v452, %v344
        %v457 = vsub.f32 %v453, %v345
        %v458 = vmax.f32 %v454, %v455
        %v459 = vmax.f32 %v456, %v457
        %v460 = vmax.f32 %v458, %v459
        %v461 = vrot.slane %v460, 4
        %v462 = vmax.f32 %v460, %v461
        %v463 = vrot.slane %v462, 2
        %v464 = vmax.f32 %v462, %v463
        %v465 = vrot.slane %v464, 1
        %v466 = vmax.f32 %v464, %v465
        %v467 = vsub.f32 %v454, %v466
        %v468 = vsub.f32 %v455, %v466
        %v469 = vsub.f32 %v456, %v466
        %v470 = vsub.f32 %v457, %v466
        %v471 = vmul.f32 %v467, 1.442695
        %v472 = vpow.pop %v471
        %v473 = vmul.f32 %v468, 1.442695
        %v474 = vpow.pop %v473
        %v475 = vmul.f32 %v469, 1.442695
        %v476 = vpow.pop %v475
        %v477 = vmul.f32 %v470, 1.442695
        %v478 = vpow.pop %v477
        %v479 = vadd.f32 %v472, %v474
        %v480 = vadd.f32 %v479, %v476
        %v481 = vadd.f32 %v480, %v478
        %v482 = vrot.slane %v481, 4
        %v483 = vadd.f32 %v481, %v482
        %v484 = vrot.slane %v483, 2
        %v485 = vadd.f32 %v483, %v484
        %v486 = vrot.slane %v485, 1
        %v487 = vadd.f32 %v485, %v486
        %v488 = vlog2.pop %v487
        %v489 = vmul.f32 %v488, 0.6931472
        %v490 = vadd.f32 %v489, %v466
        %v491 = vsub.f32 %v490, %v308
        %v492 = vsub.f32 %v491, %v331
        %v493 = vsub.f32 %v492, 2e-06
        %v494 = vmul.f32 %v314, %v427
        %v495 = vmul.f32 %v316, %v429
        %v496 = vmul.f32 %v318, %v431
        %v497 = vmul.f32 %v320, %v433
        %v498 = vadd.f32 %v494, %v495
        %v499 = vadd.f32 %v498, %v496
        %v500 = vadd.f32 %v499, %v497
        %v501 = vrot.slane %v500, 4
        %v502 = vadd.f32 %v500, %v501
        %v503 = vrot.slane %v502, 2
        %v504 = vadd.f32 %v502, %v503
        %v505 = vrot.slane %v504, 1
        %v506 = vadd.f32 %v504, %v505
        %v507 = vmul.f32 %v506, 0.999999
        %v508 = vmul.f32 %v329, 5e-07
        %v509 = vadd.f32 %v507, %v508
        %v510 = vlog2.pop %v509
        %v511 = vmul.f32 %v510, 0.6931472
        %v512 = vmul.f32 %v329, 0.9999995
        %v513 = vsub.f32 %v512, %v507
        %v514 = vlog2.pop %v513
        %v515 = vmul.f32 %v514, 0.6931472
        %v516 = vsub.f32 %v511, %v515
        %517 = vst [vmem:[%s201] sm:$0x1] %v516
        %v518 = vadd.f32 %v493, -1.0000005e-06
        %v519 = vsub.f32 %v518, %v511
        %v520 = vsub.f32 %v519, %v515
        %v521 = vmul.f32 %v331, 2.0
        %v522 = vadd.f32 %v520, %v521
        %523 = vst [vmem:[%s207] sm:$0x1] %v522
        %s524 = sand.u32 %s84, 1
        %s525 = scalar_lea.sflag [#allocation4], %s524
        %s526 = sand.u32 %s84, 1
        %s527 = scalar_lea.vmem [#allocation5], %s526
        %s528 = sand.u32 %s110, 1
        %s529 = scalar_lea.sflag [#allocation7], %s528
        %s530 = sand.u32 %s110, 1
        %s531 = scalar_lea.vmem [#allocation6], %s530
        // Predicated region
        $region33: #{tpu_custom_call.1} parent=27 // pred_check
          %p532 = pneg %p94
        $region34: #{tpu_custom_call.1} parent=27 // pred_check_branch
          %534 = sbr.rel (%p532) target = $region36
        $region35: #{tpu_custom_call.1} parent=27 // pred_region
          %s536 = ssub.s32 16, 16
          %537 = vsyncadd %s525, %s536
          %s538 = smul.addr %s24, 16
          %s539 = scalar_lea.hbm %s2, %s538
          %s541 = sshll.u32 %s527, 4
          %s542 = int_to_ptr.vmem [resolvable:$true] %s541
          %544 = dma.vmem_to_hbm [thread:$0]  %s542, 16, %s539, %s525
        $region36: #{tpu_custom_call.1} parent=27 // pred_fallthru
          _
        // Predicated region
        $region37: #{tpu_custom_call.1} parent=27 // pred_check
          %p545 = pneg %p120
        $region38: #{tpu_custom_call.1} parent=27 // pred_check_branch
          %547 = sbr.rel (%p545) target = $region40
        $region39: #{tpu_custom_call.1} parent=27 // pred_region
          %s549 = ssub.s32 16, 16
          %550 = vsyncadd %s529, %s549
          %s551 = smul.addr %s24, 16
          %s552 = scalar_lea.hbm %s3, %s551
          %s554 = sshll.u32 %s531, 4
          %s555 = int_to_ptr.vmem [resolvable:$true] %s554
          %557 = dma.vmem_to_hbm [thread:$0]  %s555, 16, %s552, %s529
        $region40: #{tpu_custom_call.1} parent=27 // pred_fallthru
          _
      $region28: #{tpu_custom_call.1} parent=5 // pred_fallthru
        _
      %p558 = scmp.le.s32.totalorder 2, %s19
      // Predicated region
      $region41: #{tpu_custom_call.1} parent=5 // pred_check
        %p559 = pneg %p558
      $region42: #{tpu_custom_call.1} parent=5 // pred_check_branch
        %561 = sbr.rel (%p559) target = $region44
      $region43: #{tpu_custom_call.1} parent=5 // pred_region
        %s562 = ssub.s32 %s19, 2
        // Predicated region
        $region45: #{tpu_custom_call.1} parent=43 // pred_check
          %p563 = pneg %p100
        $region46: #{tpu_custom_call.1} parent=43 // pred_check_branch
          %565 = sbr.rel (%p563) target = $region48
        $region47: #{tpu_custom_call.1} parent=43 // pred_region
          %s566 = sand.u32 %s85, 1
          %s567 = scalar_lea.sflag [#allocation4], %s566
          %s568 = sand.u32 %s85, 1
          %s569 = scalar_lea.vmem [#allocation5], %s568
          %570 = dma.done %s567, 16
        $region48: #{tpu_custom_call.1} parent=43 // pred_fallthru
          _
        // Predicated region
        $region49: #{tpu_custom_call.1} parent=43 // pred_check
          %p571 = pneg %p126
        $region50: #{tpu_custom_call.1} parent=43 // pred_check_branch
          %573 = sbr.rel (%p571) target = $region52
        $region51: #{tpu_custom_call.1} parent=43 // pred_region
          %s574 = sand.u32 %s111, 1
          %s575 = scalar_lea.sflag [#allocation7], %s574
          %s576 = sand.u32 %s111, 1
          %s577 = scalar_lea.vmem [#allocation6], %s576
          %578 = dma.done %s575, 16
        $region52: #{tpu_custom_call.1} parent=43 // pred_fallthru
          _
      $region44: #{tpu_custom_call.1} parent=5 // pred_fallthru
        _
    $region6: #{tpu_custom_call.1} parent=1 // loop_footer
      %s23 = sadd.s32 1, %s19
    $region7: #{tpu_custom_call.1} parent=1 // loop_footer_branch
      %18 = sbr.rel target = $region3
    $region8: #{tpu_custom_call.1} parent=1 // loop_exit
      _
    %579 = vsyncpa [#allocation3], 1
    %s580 = scalar_lea.sflag [#allocation3], 1
    %581 = vsyncpa %s580, 1
    %582 = vsyncpa [#allocation4], 1
    %s583 = scalar_lea.sflag [#allocation4], 1
    %584 = vsyncpa %s583, 1
    %585 = vsyncpa [#allocation7], 1
    %s586 = scalar_lea.sflag [#allocation7], 1
    %587 = vsyncpa %s586, 1

</llo_original>
